<compile_context>
chip_gen: v7x
topology: tpu7x:2x2x1
jax: 0.10.0
libtpu: 0.0.40
codegen_flags: <defaults>
</compile_context>

<pallas_src>
import jax
import jax.numpy as jnp
from jax.experimental import pallas as pl
from jax.experimental.pallas import tpu as pltpu


def _patch_proj_kernel(patches_ref, w_ref, bias_ref, pos_ref, out_ref):
    # patches_ref: (TM, K)   one row-tile of flattened patches for one batch
    # w_ref:       (K, E)    flattened conv weight (VMEM-resident, constant map)
    # bias_ref:    (1, E)
    # pos_ref:     (TM, E)   positional embeddings for these patch rows (pos[1:])
    # out_ref:     (TM, E)
    proj = jnp.dot(
        patches_ref[...], w_ref[...], preferred_element_type=jnp.float32
    )  # (TM, E), MXU with f32 accumulate
    out_ref[...] = (proj + bias_ref[...] + pos_ref[...]).astype(out_ref.dtype)


def _pick_tm(n):
    # Largest MXU-friendly row tile (multiple of 8, <= 512) not exceeding N.
    # Pallas handles a ragged last tile (padded reads / clipped writes).
    for tm in (512, 256, 128, 64, 32, 16, 8):
        if tm <= n:
            return tm
    return n  # N < 8: use the full extent (allowed as a full-dim block)


def patch_embedding_forward(x, conv_w, conv_b, cls_token, positions, patch_size,
                            tm=None):
    """x: (B, C, H, W) f32; conv_w: (E, C, p, p); conv_b: (E,);
    cls_token: (1, 1, E); positions: (N+1, E). Returns (B, N+1, E)."""
    B, C, H, W = x.shape
    E = conv_w.shape[0]
    p = patch_size
    Hp, Wp = H // p, W // p
    N = Hp * Wp
    K = C * p * p

    # Patch extraction (XLA glue).  Flattening order (c, i, j) matches the
    # PyTorch Conv2d weight layout (E, C, p, p).
    # TODO(synk): this materializes one transposed copy of x in HBM; an
    # in-kernel (C, p, p) rearrangement of a whole-image VMEM block would
    # remove that extra HBM pass, at the cost of an in-kernel transpose.
    patches = x.reshape(B, C, Hp, p, Wp, p)
    patches = patches.transpose(0, 2, 4, 1, 3, 5).reshape(B, N, K)

    w_flat = conv_w.reshape(E, K).T          # (K, E)
    bias2d = conv_b.reshape(1, E)            # (1, E)
    pos_patch = positions[1:]                # (N, E) — pos rows for patch tokens

    if tm is None:
        tm = _pick_tm(N)
    m_tiles = pl.cdiv(N, tm)

    proj = pl.pallas_call(
        _patch_proj_kernel,
        out_shape=jax.ShapeDtypeStruct((B, N, E), x.dtype),
        grid=(B, m_tiles),
        in_specs=[
            # (None, tm, K): squeeze the batch dim -> kernel sees (tm, K)
            pl.BlockSpec((None, tm, K), lambda b, m: (b, m, 0)),
            pl.BlockSpec((K, E), lambda b, m: (0, 0)),      # weight, resident
            pl.BlockSpec((1, E), lambda b, m: (0, 0)),      # bias, resident
            pl.BlockSpec((tm, E), lambda b, m: (m, 0)),     # pos rows for tile m
        ],
        out_specs=pl.BlockSpec((None, tm, E), lambda b, m: (b, m, 0)),
        compiler_params=pltpu.CompilerParams(
            dimension_semantics=("parallel", "parallel"),
            # Budgeted against v7x (64 MiB physical); trivially fits at demo
            # and ViT-Base scale (2x(tm*K) + K*E + 2x(tm*E) f32 << 32 MiB).
            vmem_limit_bytes=32 * 1024 * 1024,
        ),
    )(patches, w_flat, bias2d, pos_patch)

    # cls-token row (+ its positional embedding) prepended outside the kernel:
    # keeps the Pallas output slab 8/128-aligned (no offset-by-1 stores).
    cls_row = (cls_token.reshape(1, E) + positions[:1]).astype(x.dtype)  # (1, E)
    cls_rows = jnp.broadcast_to(cls_row[None, :, :], (B, 1, E))
    return jnp.concatenate([cls_rows, proj], axis=1)


def reference_forward(x, conv_w, conv_b, cls_token, positions, patch_size):
    """Pure-JAX reference (mirrors the PyTorch forward) for sanity checking."""
    B, C, H, W = x.shape
    E = conv_w.shape[0]
    p = patch_size
    Hp, Wp = H // p, W // p
    N = Hp * Wp
    patches = x.reshape(B, C, Hp, p, Wp, p).transpose(0, 2, 4, 1, 3, 5)
    patches = patches.reshape(B, N, C * p * p)
    proj = patches @ conv_w.reshape(E, -1).T + conv_b  # (B, N, E)
    cls = jnp.broadcast_to(cls_token, (B, 1, E))
    out = jnp.concatenate([cls, proj], axis=1) + positions
    return out


if __name__ == "__main__":
    # Small shapes consistent with the module: image 16x16, patch 4, C=4, E=32.
    image_size, patch_size, in_channels, embed_dim = 16, 4, 4, 32
    batch = 2
    num_patches = (image_size // patch_size) ** 2

    key = jax.random.PRNGKey(0)
    kx, kw, kb, kc, kp = jax.random.split(key, 5)
    x = jax.random.normal(kx, (batch, in_channels, image_size, image_size),
                          dtype=jnp.float32)
    conv_w = jax.random.normal(
        kw, (embed_dim, in_channels, patch_size, patch_size), dtype=jnp.float32
    ) * 0.02
    conv_b = jax.random.normal(kb, (embed_dim,), dtype=jnp.float32) * 0.02
    cls_token = jax.random.normal(kc, (1, 1, embed_dim), dtype=jnp.float32)
    positions = jax.random.normal(kp, (num_patches + 1, embed_dim),
                                  dtype=jnp.float32)

    out = patch_embedding_forward(x, conv_w, conv_b, cls_token, positions,
                                  patch_size)
    out = jax.block_until_ready(out)

    ref = reference_forward(x, conv_w, conv_b, cls_token, positions, patch_size)
    assert out.shape == (batch, num_patches + 1, embed_dim), out.shape
    assert jnp.allclose(out, ref, atol=1e-5, rtol=1e-5), "mismatch vs reference"

    print("KERNEL_OK")
</pallas_src>

<mosaic_0001>
module attributes {stable_mosaic.version = 11 : i64} {
  func.func @_patch_proj_kernel(%arg0: i32, %arg1: i32, %arg2: memref<1x16x64xf32, #tpu.memory_space<vmem>>, %arg3: memref<64x32xf32, #tpu.memory_space<vmem>>, %arg4: memref<1x32xf32, #tpu.memory_space<vmem>>, %arg5: memref<16x32xf32, #tpu.memory_space<vmem>>, %arg6: memref<1x16x32xf32, #tpu.memory_space<vmem>>) attributes {dimension_semantics = [#tpu.dimension_semantics<parallel>, #tpu.dimension_semantics<parallel>], iteration_bounds = array<i64: 2, 1>, scalar_prefetch = 0 : i64, scratch_operands = 0 : i64, tpu.core_type = #tpu.core_type<tc>, window_params = [{transform_indices = @transform_0, window_bounds = array<i64: 1, 16, 64>}, {pipeline_mode = #tpu.pipeline_mode<synchronous>, transform_indices = @transform_1, window_bounds = array<i64: 64, 32>}, {pipeline_mode = #tpu.pipeline_mode<synchronous>, transform_indices = @transform_2, window_bounds = array<i64: 1, 32>}, {transform_indices = @transform_3, window_bounds = array<i64: 16, 32>}, {transform_indices = @transform_4, window_bounds = array<i64: 1, 16, 32>}]} {
    %c0 = arith.constant 0 : index
    %c0_0 = arith.constant 0 : index
    %c0_1 = arith.constant 0 : index
    %0 = vector.load %arg2[%c0, %c0_0, %c0_1] : memref<1x16x64xf32, #tpu.memory_space<vmem>>, vector<1x16x64xf32>
    %1 = vector.shape_cast %0 : vector<1x16x64xf32> to vector<16x64xf32>
    %c0_2 = arith.constant 0 : index
    %c0_3 = arith.constant 0 : index
    %2 = vector.load %arg3[%c0_2, %c0_3] : memref<64x32xf32, #tpu.memory_space<vmem>>, vector<64x32xf32>
    %cst = arith.constant dense<0.000000e+00> : vector<16x32xf32>
    %3 = tpu.matmul %1, %2, %cst {dimension_numbers = #tpu.dot_dimension_numbers<[1], [0], [0], [1], [0, 0, 1, 1], [], []>} : vector<16x64xf32>, vector<64x32xf32>, vector<16x32xf32> -> vector<16x32xf32>
    %c0_4 = arith.constant 0 : index
    %c0_5 = arith.constant 0 : index
    %4 = vector.load %arg4[%c0_4, %c0_5] : memref<1x32xf32, #tpu.memory_space<vmem>>, vector<1x32xf32>
    %5 = vector.broadcast %4 : vector<1x32xf32> to vector<16x32xf32>
    %6 = arith.addf %3, %5 : vector<16x32xf32>
    %c0_6 = arith.constant 0 : index
    %c0_7 = arith.constant 0 : index
    %7 = vector.load %arg5[%c0_6, %c0_7] : memref<16x32xf32, #tpu.memory_space<vmem>>, vector<16x32xf32>
    %8 = arith.addf %6, %7 : vector<16x32xf32>
    %c0_8 = arith.constant 0 : index
    %c0_9 = arith.constant 0 : index
    %c0_10 = arith.constant 0 : index
    %9 = vector.load %arg6[%c0_8, %c0_9, %c0_10] : memref<1x16x32xf32, #tpu.memory_space<vmem>>, vector<1x16x32xf32>
    %10 = vector.shape_cast %9 : vector<1x16x32xf32> to vector<16x32xf32>
    %11 = vector.shape_cast %8 : vector<16x32xf32> to vector<1x16x32xf32>
    tpu.vector_store %arg6[%c0_8, %c0_9, %c0_10], %11 {strides = array<i32>} : memref<1x16x32xf32, #tpu.memory_space<vmem>>, vector<1x16x32xf32>,
    return
  }
  func.func @transform_0(%arg0: i32, %arg1: i32) -> (i32, i32, i32) {
    %c0_i32 = arith.constant 0 : i32
    %c0_i32_0 = arith.constant 0 : i32
    return %arg0, %arg1, %c0_i32 : i32, i32, i32
  }
  func.func @transform_1(%arg0: i32, %arg1: i32) -> (i32, i32) {
    %c0_i32 = arith.constant 0 : i32
    %c0_i32_0 = arith.constant 0 : i32
    %c0_i32_1 = arith.constant 0 : i32
    return %c0_i32, %c0_i32_0 : i32, i32
  }
  func.func @transform_2(%arg0: i32, %arg1: i32) -> (i32, i32) {
    %c0_i32 = arith.constant 0 : i32
    %c0_i32_0 = arith.constant 0 : i32
    %c0_i32_1 = arith.constant 0 : i32
    return %c0_i32, %c0_i32_0 : i32, i32
  }
  func.func @transform_3(%arg0: i32, %arg1: i32) -> (i32, i32) {
    %c0_i32 = arith.constant 0 : i32
    %c0_i32_0 = arith.constant 0 : i32
    return %arg1, %c0_i32 : i32, i32
  }
  func.func @transform_4(%arg0: i32, %arg1: i32) -> (i32, i32, i32) {
    %c0_i32 = arith.constant 0 : i32
    %c0_i32_0 = arith.constant 0 : i32
    return %arg0, %arg1, %c0_i32 : i32, i32, i32
  }
}

</mosaic_0001>

<llo_original>
// kernel: tpu_custom_call.1
$region0: #{tpu_custom_call.1}
  #allocation0 [shape = 'u32[]', space=smem, size = 0x4, offset = 0x4, fixed_abs, tag = 'smem constant byte address 0x4 - core index']
  #allocation1 [shape = 'u32[144,128]{1,0:T(1,128)}', space=vmem, size = 0x12000, scoped, tag = 'internal scratch']
  %s0 = inlined_call_operand.vmem [shape: f32[2,16,64], index: 0, kind: input, shape index: {}]
  %s1 = inlined_call_operand.vmem [shape: f32[64,32], index: 1, kind: input, shape index: {}]
  %s2 = inlined_call_operand.vmem [shape: f32[1,32], index: 2, kind: input, shape index: {}]
  %s3 = inlined_call_operand.vmem [shape: f32[16,32], index: 3, kind: input, shape index: {}]
  %s4 = inlined_call_operand.hbm [shape: f32[2,16,32], index: 4, kind: output, shape index: {}]
  %s5 = sld [smem:[#allocation0]]
  $region49: #{tpu_custom_call.1} parent=0
    _
  %s7 = ssub.s32 1, %s5
  %s8 = scalar_select 0, %s7, %s5
  $region1: #{tpu_custom_call.1} parent=0
    #allocation2 [shape = 'u8[16384]{0}', space=vmem, size = 0x4000, scoped, tag = 'output window, operand 0']
    #allocation3 [shape = 's32[2]{0}', space=sflag, size = 0x8, scoped, tag = 'scoped memory for tpu_custom_call.1']
    %9 = vsyncpa [#allocation3], 0
    %s10 = scalar_lea.sflag [#allocation3], 1
    %11 = vsyncpa %s10, 0
    loop: start=0, step=1, limit=4
    $region2: #{tpu_custom_call.1} parent=1 // loop_pre_header
      _
    $region3: #{tpu_custom_call.1} parent=1 // loop_header
      %s13 = sphi 0, %s17
      %p14 = scmp.ge.s32.totalorder %s13, 4
      %s20 = sphi 0, %s32
      %s21 = sphi 0, %s28
      %s22 = sphi 0, %s20
      %s23 = sphi 0, %s21
      %s24 = sphi 0, %s22
      %s25 = sphi 0, %s23
      %s37 = sphi 0, %s39
      %s40 = sphi 0, %s37
      %s41 = sphi 0, %s40
      %s57 = sphi 0, %s41
      %s61 = sphi 0, %s61
      %s63 = sphi 0, %s61
      %s64 = sphi 0, %s63
      %s78 = sphi 0, %s64
      %s82 = sphi 0, %s82
      %s84 = sphi 0, %s82
      %s85 = sphi 0, %s84
      %s99 = sphi 0, %s85
      %s105 = sphi 0, %s107
      %s108 = sphi 0, %s105
      %s109 = sphi 0, %s108
      %s125 = sphi 0, %s109
      %s133 = sphi 0, %s135
      %s136 = sphi 0, %s133
      %s137 = sphi 0, %s136
      %s153 = sphi 0, %s137
    $region4: #{tpu_custom_call.1} parent=1 // loop_header_branch
      %16 = sbr.rel (%p14) target = $region8
    $region5: #{tpu_custom_call.1} parent=1 // loop_body
      %s18 = ssub.s32 %s13, 1
      %s19 = ssub.s32 %s13, 2
      %s26 = sadd.s32 1, %s21
      %p27 = scmp.ge.s32.totalorder %s26, 1
      %s28 = scalar_select %p27, 0, %s26
      %s29 = sadd.s32 1, %s20
      %s30 = scalar_select %p27, %s29, %s20
      %p31 = scmp.ge.s32.totalorder %s30, 2
      %s32 = scalar_select %p31, 0, %s30
      %s33 = ssub.s32 %s20, %s32
      %s34 = ssub.s32 %s21, %s28
      %s35 = sor.u32 %s33, %s34
      %p36 = scmp.eq.s32.totalorder %s35, 0
      %s38 = sadd.s32 %s37, 1
      %s39 = scalar_select %p36, %s37, %s38
      %p42 = pneg %p36
      %p43 = scmp.eq.s32.totalorder %s13, 1
      %p44 = por %p42, %p43
      %p45 = scmp.ne.s32.totalorder %s37, %s40
      %p46 = scmp.eq.s32.totalorder %s13, 0
      %p47 = por %p45, %p46
      %p48 = scmp.ne.s32.totalorder %s37, %s40
      %p49 = scmp.eq.s32.totalorder %s18, 1
      %p50 = por %p48, %p49
      %p51 = scmp.ne.s32.totalorder %s40, %s41
      %p52 = scmp.eq.s32.totalorder %s18, 0
      %p53 = por %p51, %p52
      %p54 = scmp.ne.s32.totalorder %s40, %s41
      %p55 = scmp.eq.s32.totalorder %s19, 1
      %p56 = por %p54, %p55
      %p58 = scmp.ne.s32.totalorder %s41, %s57
      %p59 = scmp.eq.s32.totalorder %s19, 0
      %p60 = por %p58, %p59
      %s62 = sadd.s32 %s61, 1
      %p65 = scmp.eq.s32.totalorder %s13, 1
      %p66 = scmp.ne.s32.totalorder %s61, %s63
      %p67 = scmp.eq.s32.totalorder %s13, 0
      %p68 = por %p66, %p67
      %p69 = scmp.ne.s32.totalorder %s61, %s63
      %p70 = scmp.eq.s32.totalorder %s18, 1
      %p71 = por %p69, %p70
      %p72 = scmp.ne.s32.totalorder %s63, %s64
      %p73 = scmp.eq.s32.totalorder %s18, 0
      %p74 = por %p72, %p73
      %p75 = scmp.ne.s32.totalorder %s63, %s64
      %p76 = scmp.eq.s32.totalorder %s19, 1
      %p77 = por %p75, %p76
      %p79 = scmp.ne.s32.totalorder %s64, %s78
      %p80 = scmp.eq.s32.totalorder %s19, 0
      %p81 = por %p79, %p80
      %s83 = sadd.s32 %s82, 1
      %p86 = scmp.eq.s32.totalorder %s13, 1
      %p87 = scmp.ne.s32.totalorder %s82, %s84
      %p88 = scmp.eq.s32.totalorder %s13, 0
      %p89 = por %p87, %p88
      %p90 = scmp.ne.s32.totalorder %s82, %s84
      %p91 = scmp.eq.s32.totalorder %s18, 1
      %p92 = por %p90, %p91
      %p93 = scmp.ne.s32.totalorder %s84, %s85
      %p94 = scmp.eq.s32.totalorder %s18, 0
      %p95 = por %p93, %p94
      %p96 = scmp.ne.s32.totalorder %s84, %s85
      %p97 = scmp.eq.s32.totalorder %s19, 1
      %p98 = por %p96, %p97
      %p100 = scmp.ne.s32.totalorder %s85, %s99
      %p101 = scmp.eq.s32.totalorder %s19, 0
      %p102 = por %p100, %p101
      %s103 = ssub.s32 %s21, %s28
      %p104 = scmp.eq.s32.totalorder %s103, 0
      %s106 = sadd.s32 %s105, 1
      %s107 = scalar_select %p104, %s105, %s106
      %p110 = pneg %p104
      %p111 = scmp.eq.s32.totalorder %s13, 1
      %p112 = por %p110, %p111
      %p113 = scmp.ne.s32.totalorder %s105, %s108
      %p114 = scmp.eq.s32.totalorder %s13, 0
      %p115 = por %p113, %p114
      %p116 = scmp.ne.s32.totalorder %s105, %s108
      %p117 = scmp.eq.s32.totalorder %s18, 1
      %p118 = por %p116, %p117
      %p119 = scmp.ne.s32.totalorder %s108, %s109
      %p120 = scmp.eq.s32.totalorder %s18, 0
      %p121 = por %p119, %p120
      %p122 = scmp.ne.s32.totalorder %s108, %s109
      %p123 = scmp.eq.s32.totalorder %s19, 1
      %p124 = por %p122, %p123
      %p126 = scmp.ne.s32.totalorder %s109, %s125
      %p127 = scmp.eq.s32.totalorder %s19, 0
      %p128 = por %p126, %p127
      %s129 = ssub.s32 %s20, %s32
      %s130 = ssub.s32 %s21, %s28
      %s131 = sor.u32 %s129, %s130
      %p132 = scmp.eq.s32.totalorder %s131, 0
      %s134 = sadd.s32 %s133, 1
      %s135 = scalar_select %p132, %s133, %s134
      %p138 = pneg %p132
      %p139 = scmp.eq.s32.totalorder %s13, 1
      %p140 = por %p138, %p139
      %p141 = scmp.ne.s32.totalorder %s133, %s136
      %p142 = scmp.eq.s32.totalorder %s13, 0
      %p143 = por %p141, %p142
      %p144 = scmp.ne.s32.totalorder %s133, %s136
      %p145 = scmp.eq.s32.totalorder %s18, 1
      %p146 = por %p144, %p145
      %p147 = scmp.ne.s32.totalorder %s136, %s137
      %p148 = scmp.eq.s32.totalorder %s18, 0
      %p149 = por %p147, %p148
      %p150 = scmp.ne.s32.totalorder %s136, %s137
      %p151 = scmp.eq.s32.totalorder %s19, 1
      %p152 = por %p150, %p151
      %p154 = scmp.ne.s32.totalorder %s137, %s153
      %p155 = scmp.eq.s32.totalorder %s19, 0
      %p156 = por %p154, %p155
      %p157 = scmp.le.s32.totalorder 1, %s13
      %p158 = scmp.lt.s32.totalorder %s13, 3
      %p159 = pnand %p157, %p158
      %p160 = pneg %p159
      // Predicated region
      $region9: #{tpu_custom_call.1} parent=5 // pred_check
        _
      $region10: #{tpu_custom_call.1} parent=5 // pred_check_branch
        %162 = sbr.rel (%p159) target = $region12
      $region11: #{tpu_custom_call.1} parent=5 // pred_region
        %s163 = ssub.s32 %s13, 1
        // Predicated region
        $region13: #{tpu_custom_call.1} parent=11 // pred_check
          %p164 = pneg %p74
        $region14: #{tpu_custom_call.1} parent=11 // pred_check_branch
          %166 = sbr.rel (%p164) target = $region16
        $region15: #{tpu_custom_call.1} parent=11 // pred_region
          _
        $region16: #{tpu_custom_call.1} parent=11 // pred_fallthru
          _
        // Predicated region
        $region17: #{tpu_custom_call.1} parent=11 // pred_check
          %p167 = pneg %p95
        $region18: #{tpu_custom_call.1} parent=11 // pred_check_branch
          %169 = sbr.rel (%p167) target = $region20
        $region19: #{tpu_custom_call.1} parent=11 // pred_region
          _
        $region20: #{tpu_custom_call.1} parent=11 // pred_fallthru
          _
        // Predicated region
        $region21: #{tpu_custom_call.1} parent=11 // pred_check
          %p170 = pneg %p121
        $region22: #{tpu_custom_call.1} parent=11 // pred_check_branch
          %172 = sbr.rel (%p170) target = $region24
        $region23: #{tpu_custom_call.1} parent=11 // pred_region
          %s173 = smul.u32 2, %s23
          %p174 = scmp.lt.s32.totalorder %s173, 1
          %s175 = scalar_select %p174, %s173, 1
          %s176 = smul.addr %s175, 8
          %s177 = scalar_lea.vmem %s3, %s176
          %s178 = smul.u32 2, %s23
        $region24: #{tpu_custom_call.1} parent=11 // pred_fallthru
          _
      $region12: #{tpu_custom_call.1} parent=5 // pred_fallthru
        _
      %p179 = scmp.lt.s32.totalorder %s13, 2
      // Predicated region
      $region25: #{tpu_custom_call.1} parent=5 // pred_check
        %p180 = pneg %p179
      $region26: #{tpu_custom_call.1} parent=5 // pred_check_branch
        %182 = sbr.rel (%p180) target = $region28
      $region27: #{tpu_custom_call.1} parent=5 // pred_region
        // Predicated region
        $region29: #{tpu_custom_call.1} parent=27 // pred_check
          %p183 = pneg %p47
        $region30: #{tpu_custom_call.1} parent=27 // pred_check_branch
          %185 = sbr.rel (%p183) target = $region32
        $region31: #{tpu_custom_call.1} parent=27 // pred_region
          %s186 = smul.u32 2, %s21
          %p187 = scmp.lt.s32.totalorder %s20, 1
          %s188 = scalar_select %p187, %s20, 1
          %p189 = scmp.lt.s32.totalorder %s186, 1
          %s190 = scalar_select %p189, %s186, 1
          %s191 = smul.addr %s188, 2
          %s192 = sadd.s32 %s190, %s191
          %s193 = smul.addr %s192, 8
          %s194 = scalar_lea.vmem %s0, %s193
          %s195 = smul.u32 2, %s21
        $region32: #{tpu_custom_call.1} parent=27 // pred_fallthru
          _
      $region28: #{tpu_custom_call.1} parent=5 // pred_fallthru
        _
      %p196 = scmp.le.s32.totalorder 1, %s13
      %p197 = scmp.lt.s32.totalorder %s13, 3
      %p198 = pnand %p196, %p197
      %p199 = pneg %p198
      // Predicated region
      $region33: #{tpu_custom_call.1} parent=5 // pred_check
        _
      $region34: #{tpu_custom_call.1} parent=5 // pred_check_branch
        %201 = sbr.rel (%p198) target = $region36
      $region35: #{tpu_custom_call.1} parent=5 // pred_region
        %s202 = ssub.s32 %s13, 1
        %s203 = smul.u32 2, %s23
        %p204 = scmp.lt.s32.totalorder %s22, 1
        %s205 = scalar_select %p204, %s22, 1
        %p206 = scmp.lt.s32.totalorder %s203, 1
        %s207 = scalar_select %p206, %s203, 1
        %s208 = smul.addr %s205, 2
        %s209 = sadd.s32 %s207, %s208
        %s210 = smul.addr %s209, 8
        %s211 = scalar_lea.vmem %s0, %s210
        %p212 = pneg %p53
        %p213 = pneg %p50
        %p214 = pneg %p74
        %p215 = pneg %p71
        %p216 = pneg %p95
        %p217 = pneg %p92
        %s218 = smul.u32 2, %s23
        %p219 = scmp.lt.s32.totalorder %s218, 1
        %s220 = scalar_select %p219, %s218, 1
        %s221 = smul.addr %s220, 8
        %s222 = scalar_lea.vmem %s3, %s221
        %p223 = pneg %p121
        %p224 = pneg %p118
        %p225 = pneg %p149
        %p226 = pneg %p146
        %s227 = sand.u32 %s136, 1
        %s228 = scalar_lea.sflag [#allocation3], %s227
        %s229 = sand.u32 %s136, 1
        %s230 = smul.addr %s229, 16
        %s231 = scalar_lea.vmem [#allocation2], %s230
        %s232 = smul.u32 2, %s23
        %p233 = scmp.lt.s32.totalorder %s22, 1
        %s234 = scalar_select %p233, %s22, 1
        %p235 = scmp.lt.s32.totalorder %s232, 1
        %s236 = scalar_select %p235, %s232, 1
        %s237 = smul.addr %s234, 2
        %s238 = sadd.s32 %s236, %s237
        %s239 = smul.addr %s238, 8
        %s240 = scalar_lea.vmem %s0, %s239
        %s241 = smul.u32 2, %s23
        %s242 = smul.u32 2, %s23
        %p243 = scmp.lt.s32.totalorder %s242, 1
        %s244 = scalar_select %p243, %s242, 1
        %s245 = smul.addr %s244, 8
        %s246 = scalar_lea.vmem %s3, %s245
        %s247 = smul.u32 2, %s23
        %s248 = smul.u32 2, %s23
        %v249 = vld [vmem:[%s240] sm:$0xff]
        %v250 = vld [vmem:[%s240 + $0x8] sm:$0xff]
        %v251 = vld [vmem:[%s1] sm:$0xff]
        %v252 = vld [vmem:[%s1 + $0x8] sm:$0xff]
        %v253 = vld [vmem:[%s1 + $0x10] sm:$0xff]
        %v254 = vld [vmem:[%s1 + $0x18] sm:$0xff]
        %v255 = vld [vmem:[%s1 + $0x20] sm:$0xff]
        %v256 = vld [vmem:[%s1 + $0x28] sm:$0xff]
        %v257 = vld [vmem:[%s1 + $0x30] sm:$0xff]
        %v258 = vld [vmem:[%s1 + $0x38] sm:$0xff]
        %v259 = vld [vmem:[%s2] sm:$0x1]
        %v261 = vlaneseq
        %v262 = vshrl.u32 %v261, 7
        %v263 = vsub.s32 0, %v262
        %v264 = vrot.slane %v259, %v263
        %vm266 = vcmask 523264
        %v268 = vsel %vm266, %v249, 0
        %v271 = vsel %vm266, %v250, 0
        %273 = vmatprep.subr.mxu0 0.0
        %274 = vmatpush1.msra.mxu0 %v251
        %275 = vmatprep.subr.mxu0 0.0
        %276 = vmatpush1.msra.mxu0 %v252
        %277 = vmatprep.subr.mxu0 0.0
        %278 = vmatpush1.msra.mxu0 %v253
        %279 = vmatprep.subr.mxu0 0.0
        %280 = vmatpush1.msra.mxu0 %v254
        %281 = vmatprep.subr.mxu0 0.0
        %282 = vmatpush1.msra.mxu0 %v255
        %283 = vmatprep.subr.mxu0 0.0
        %284 = vmatpush1.msra.mxu0 %v256
        %285 = vmatprep.subr.mxu0 0.0
        %286 = vmatpush1.msra.mxu0 %v257
        %287 = vmatprep.subr.mxu0 0.0
        %288 = vmatpush1.msra.mxu0 %v258
        %289 = vmatprep.subr.mxu0 0.0
        %290 = vmatpush1.msra.mxu0 0.0
        %291 = vmatprep.subr.mxu0 0.0
        %292 = vmatpush1.msra.mxu0 0.0
        %293 = vmatprep.subr.mxu0 0.0
        %294 = vmatpush1.msra.mxu0 0.0
        %295 = vmatprep.subr.mxu0 0.0
        %296 = vmatpush1.msra.mxu0 0.0
        %297 = vmatprep.subr.mxu0 0.0
        %298 = vmatpush1.msra.mxu0 0.0
        %299 = vmatprep.subr.mxu0 0.0
        %300 = vmatpush1.msra.mxu0 0.0
        %301 = vmatprep.subr.mxu0 0.0
        %302 = vmatpush1.msra.mxu0 0.0
        %303 = vmatprep.subr.mxu0 0.0
        %304 = vmatpush1.msra.mxu0 0.0
        %305 = vmatprep.subr.mxu0 0.0
        %306 = vmatpush1.msra.mxu0 0.0
        %307 = vmatprep.subr.mxu0 0.0
        %308 = vmatpush1.msra.mxu0 0.0
        %309 = vmatprep.subr.mxu0 0.0
        %310 = vmatpush1.msra.mxu0 0.0
        %311 = vmatprep.subr.mxu0 0.0
        %312 = vmatpush1.msra.mxu0 0.0
        %313 = vmatprep.subr.mxu0 0.0
        %314 = vmatpush1.msra.mxu0 0.0
        %315 = vmatprep.subr.mxu0 0.0
        %316 = vmatpush1.msra.mxu0 0.0
        %317 = vmatprep.subr.mxu0 0.0
        %318 = vmatpush1.msra.mxu0 0.0
        %319 = vmatprep.subr.mxu0 0.0
        %320 = vmatpush1.msra.mxu0 0.0
        %321 = vmatprep.subr.mxu0 0.0
        %322 = vmatpush1.msra.mxu0 0.0
        %323 = vmatprep.subr.mxu0 0.0
        %324 = vmatpush1.msra.mxu0 0.0
        %325 = vmatprep.subr.mxu0 0.0
        %326 = vmatpush1.msra.mxu0 0.0
        %327 = vmatprep.subr.mxu0 0.0
        %328 = vmatpush1.msra.mxu0 0.0
        %329 = vmatprep.subr.mxu0 0.0
        %330 = vmatpush1.msra.mxu0 0.0
        %331 = vmatprep.subr.mxu0 0.0
        %332 = vmatpush1.msra.mxu0 0.0
        %333 = vmatprep.subr.mxu0 0.0
        %334 = vmatpush1.msra.mxu0 0.0
        %335 = vmatprep.subr.mxu0 0.0
        %336 = vmatpush1.msra.mxu0 0.0
        %337 = vmatprep.mubr.f32.mxu0 0.0
        %338 = vmatmul.mubr.f32.gmra.mrb[0].mxu0 %v268
        %v339 = vpop.f32.mrb[0].mxu0
        %v340 = vadd.f32 %v264, %v339
        %v341 = vpop.f32.mrb[0].mxu0
        %342 = vmatprep.mubr.f32.mxu0 0.0
        %343 = vmatmul.mubr.f32.gmra.mrb[0].mxu0 %v271
        %v344 = vpop.f32.mrb[0].mxu0
        %v345 = vadd.f32 %v264, %v344
        %v346 = vpop.f32.mrb[0].mxu0
        %347 = vdwg.mxu0
        %v348 = vld [vmem:[%s246] sm:$0xff]
        %v349 = vld [vmem:[%s246 + $0x8] sm:$0xff]
        %v350 = vadd.f32 %v340, %v348
        %v351 = vadd.f32 %v345, %v349
        %vm352 = vcmask 261120
        %353 = vst.msk [vmem:[%s231] sm:$0xff] %vm352, %v350
        %354 = vst.msk [vmem:[%s231 + $0x8] sm:$0xff] %vm352, %v351
        %s355 = sand.u32 %s136, 1
        %s356 = scalar_lea.sflag [#allocation3], %s355
        %s357 = sand.u32 %s136, 1
        %s358 = smul.addr %s357, 16
        %s359 = scalar_lea.vmem [#allocation2], %s358
        // Predicated region
        $region37: #{tpu_custom_call.1} parent=35 // pred_check
          %p360 = pneg %p146
        $region38: #{tpu_custom_call.1} parent=35 // pred_check_branch
          %362 = sbr.rel (%p360) target = $region40
        $region39: #{tpu_custom_call.1} parent=35 // pred_region
          %s363 = smul.u32 2, %s23
          %s365 = ssub.s32 256, 256
          %366 = vsyncadd %s356, %s365
          %s367 = smul.addr %s22, 2
          %s368 = sadd.s32 %s363, %s367
          %s369 = smul.addr %s368, 128
          %s370 = scalar_lea.hbm %s4, %s369
          %s371 = sshll.u32 %s359, 4
          %s372 = int_to_ptr.vmem [resolvable:$true] %s371
          %377 = dma.vmem_to_hbm [thread:$0]  %s372, 256, %s370, %s356, 128, 128, 8
        $region40: #{tpu_custom_call.1} parent=35 // pred_fallthru
          _
      $region36: #{tpu_custom_call.1} parent=5 // pred_fallthru
        _
      %p378 = scmp.le.s32.totalorder 2, %s13
      // Predicated region
      $region41: #{tpu_custom_call.1} parent=5 // pred_check
        %p379 = pneg %p378
      $region42: #{tpu_custom_call.1} parent=5 // pred_check_branch
        %381 = sbr.rel (%p379) target = $region44
      $region43: #{tpu_custom_call.1} parent=5 // pred_region
        %s382 = ssub.s32 %s13, 2
        // Predicated region
        $region45: #{tpu_custom_call.1} parent=43 // pred_check
          %p383 = pneg %p152
        $region46: #{tpu_custom_call.1} parent=43 // pred_check_branch
          %385 = sbr.rel (%p383) target = $region48
        $region47: #{tpu_custom_call.1} parent=43 // pred_region
          %s386 = sand.u32 %s137, 1
          %s387 = scalar_lea.sflag [#allocation3], %s386
          %s388 = sand.u32 %s137, 1
          %s389 = smul.addr %s388, 16
          %s390 = scalar_lea.vmem [#allocation2], %s389
          %391 = dma.done %s387, 256
        $region48: #{tpu_custom_call.1} parent=43 // pred_fallthru
          _
      $region44: #{tpu_custom_call.1} parent=5 // pred_fallthru
        _
    $region6: #{tpu_custom_call.1} parent=1 // loop_footer
      %s17 = sadd.s32 1, %s13
    $region7: #{tpu_custom_call.1} parent=1 // loop_footer_branch
      %12 = sbr.rel target = $region3
    $region8: #{tpu_custom_call.1} parent=1 // loop_exit
      _
    %392 = vsyncpa [#allocation3], 1
    %s393 = scalar_lea.sflag [#allocation3], 1
    %394 = vsyncpa %s393, 1

</llo_original>
